<compile_context>
chip_gen: v6e
topology: v6e:2x2x1
jax: 0.10.0
libtpu: 0.0.40
codegen_flags: <defaults>
</compile_context>

<pallas_src>
import functools
from math import gcd

import jax
import jax.numpy as jnp
from jax.experimental import pallas as pl
from jax.experimental.pallas import tpu as pltpu

_MIB = 1 << 20


# ------------------------------------------------------------------ kernels --

def _bitfit_kernel(bias_idx_ref, x_ref, bias_tbl_ref, o_ref):
    # bias_idx_ref : SMEM (bsz,) int32            (scalar-prefetched)
    # x_ref        : VMEM (TS, D) tile of x[b]    (batch dim squeezed)
    # bias_tbl_ref : VMEM (n_bias, D) resident bias table
    # o_ref        : VMEM (TS, D) output tile
    b = pl.program_id(0)
    idx = bias_idx_ref[b]
    bias_row = bias_tbl_ref[pl.ds(idx, 1), :]      # (1, D), broadcasts over sublanes
    o_ref[...] = x_ref[...] + bias_row


def _bitfit_kernel_flat(bias_idx_ref, x_ref, bias_tbl_ref, o_ref, *,
                        seq_len, batches_per_tile, bsz):
    # Small-S path: x is flattened to (B*S, D); each tile holds whole batches.
    # bias_idx_ref : SMEM (bsz,) int32
    # x_ref/o_ref  : VMEM (TR, D) tile, TR = batches_per_tile * seq_len
    # bias_tbl_ref : VMEM (n_bias, D) resident bias table
    t = pl.program_id(0)
    base_b = t * batches_per_tile

    @pl.loop(0, batches_per_tile)
    def _(j):
        b = jnp.minimum(base_b + j, bsz - 1)       # clamp for the ragged last tile
        idx = bias_idx_ref[b]
        bias_row = bias_tbl_ref[pl.ds(idx, 1), :]
        r0 = j * seq_len
        o_ref[pl.ds(r0, seq_len), :] = x_ref[pl.ds(r0, seq_len), :] + bias_row


# ------------------------------------------------------------------ wrapper --

def _device_generation():
    """Best-effort TPU generation detection ('v5e' | 'v6e' | 'v7x' | 'other')."""
    try:
        kind = jax.devices()[0].device_kind.lower()
    except Exception:
        return "other"
    if "v5 lite" in kind or "v5e" in kind or "v5lite" in kind:
        return "v5e"
    if "v6" in kind:
        return "v6e"
    if "v7" in kind or "tpu7" in kind:
        return "v7x"
    return "other"


def _vmem_capacity_bytes(gen):
    try:
        return int(pltpu.get_tpu_info().vmem_capacity_bytes)
    except Exception:
        return {"v5e": 128 * _MIB, "v6e": 128 * _MIB, "v7x": 64 * _MIB}.get(gen, 64 * _MIB)


def bitfit_bias_forward(x, bias_idx, q_bias, k_bias, v_bias, *,
                        seq_tile=None, pad_lanes=True):
    """x: (B, S, D); bias_idx: (B,) int; q/k/v_bias: (n_bias, D // 3)."""
    bsz, seq_len, dim = x.shape

    # Tiny glue in plain JAX: build the (n_bias, D) bias table once.
    # NOTE: biases are cast to x.dtype (PyTorch promotion would upcast x instead);
    # numerically benign for BitFit-sized biases.
    bias_table = jnp.concatenate([q_bias, k_bias, v_bias], axis=1).astype(x.dtype)
    n_bias = bias_table.shape[0]
    assert bias_table.shape[1] == dim, "dim must equal 3 * (dim // 3)"

    # PyTorch raises on an out-of-range bias_idx; an unchecked dynamic sublane index
    # here would silently read adjacent VMEM, so clamp it in the wrapper.
    bias_idx = jnp.clip(bias_idx.astype(jnp.int32), 0, n_bias - 1)

    itemsize = jnp.dtype(x.dtype).itemsize
    sub = 16 if itemsize == 2 else 8               # min sublane tile (bf16 vs f32)

    # Lane-dense output: pad the feature dim to a multiple of 128 so stores are
    # unmasked vst / dense HBM DMA rows.  No-op when dim % 128 == 0 (demo: 384).
    dim_p = dim
    if pad_lanes and dim % 128 != 0:
        dim_p = ((dim + 127) // 128) * 128
        x = jnp.pad(x, ((0, 0), (0, 0), (0, dim_p - dim)))
        bias_table = jnp.pad(bias_table, ((0, 0), (0, dim_p - dim)))

    # Per-generation tile / VMEM policy: per-buffer target near the roofline
    # plateau, hard row cap, and a VMEM ceiling derived from real capacity.
    gen = _device_generation()
    per_buf_bytes = {"v5e": 3 * _MIB, "v6e": 6 * _MIB, "v7x": 8 * _MIB}.get(gen, 6 * _MIB)
    row_cap = 2048 if gen == "v7x" else 1024
    vmem_ceiling = (_vmem_capacity_bytes(gen) * 3) // 4   # ~48 MiB v7x, ~96 MiB v5e/v6e

    row_bytes = dim_p * itemsize
    table_bytes = n_bias * dim_p * itemsize

    if seq_len < sub:
        # --- small-S regime: flatten (B, S) into a dense row axis ---------------
        rows = bsz * seq_len
        x2 = x.reshape(rows, dim_p)
        k0 = sub // gcd(seq_len, sub)              # min batches so k0*S % sub == 0
        row_target = max(sub, min(row_cap, per_buf_bytes // row_bytes))
        k = max(1, row_target // (k0 * seq_len)) * k0
        k = min(k, bsz)
        tile_rows = k * seq_len
        if tile_rows >= rows:                      # full extent: always a legal block
            k = bsz
            tile_rows = rows

        tile_bytes = tile_rows * row_bytes
        vmem_bytes = 4 * tile_bytes + 2 * table_bytes + 4 * _MIB
        vmem_bytes = int(min(max(vmem_bytes, 32 * _MIB), vmem_ceiling))

        kernel = functools.partial(_bitfit_kernel_flat, seq_len=seq_len,
                                   batches_per_tile=k, bsz=bsz)
        grid_spec = pltpu.PrefetchScalarGridSpec(
            num_scalar_prefetch=1,
            grid=(pl.cdiv(rows, tile_rows),),
            in_specs=[
                pl.BlockSpec((tile_rows, dim_p), lambda t, idx: (t, 0)),
                pl.BlockSpec((n_bias, dim_p), lambda t, idx: (0, 0)),
            ],
            out_specs=pl.BlockSpec((tile_rows, dim_p), lambda t, idx: (t, 0)),
        )
        out = pl.pallas_call(
            kernel,
            out_shape=jax.ShapeDtypeStruct((rows, dim_p), x.dtype),
            grid_spec=grid_spec,
            input_output_aliases={1: 0},           # donate x (after the prefetch arg)
            compiler_params=pltpu.CompilerParams(
                dimension_semantics=("parallel",),
                vmem_limit_bytes=vmem_bytes,
            ),
        )(bias_idx, x2, bias_table)
        out = out.reshape(bsz, seq_len, dim_p)
    else:
        # --- main path: (batch, seq-tile) grid ----------------------------------
        if seq_tile is None:
            # Size each pipelined buffer to the roofline plateau; bigger tiles buy
            # no bandwidth and only grow the exposed fill/drain + VMEM pressure.
            seq_tile = max(sub, min(row_cap, per_buf_bytes // row_bytes))
        seq_tile = max(sub, (seq_tile // sub) * sub)
        if seq_tile >= seq_len:
            seq_tile = seq_len                     # full extent: always a legal block

        tile_bytes = seq_tile * row_bytes
        # 2x-buffered x + out tiles, 2x-buffered resident table, Mosaic slack.
        vmem_bytes = 4 * tile_bytes + 2 * table_bytes + 4 * _MIB
        vmem_bytes = int(min(max(vmem_bytes, 32 * _MIB), vmem_ceiling))

        grid_spec = pltpu.PrefetchScalarGridSpec(
            num_scalar_prefetch=1,                 # bias_idx -> SMEM, read in kernel
            grid=(bsz, pl.cdiv(seq_len, seq_tile)),
            in_specs=[
                # x: batch dim squeezed -> kernel sees a 2-D (TS, D) tile.
                pl.BlockSpec((None, seq_tile, dim_p), lambda b, s, idx: (b, s, 0)),
                # bias table: whole (tiny) array resident, same block every step.
                pl.BlockSpec((n_bias, dim_p), lambda b, s, idx: (0, 0)),
            ],
            out_specs=pl.BlockSpec((None, seq_tile, dim_p), lambda b, s, idx: (b, s, 0)),
        )
        out = pl.pallas_call(
            _bitfit_kernel,
            out_shape=jax.ShapeDtypeStruct((bsz, seq_len, dim_p), x.dtype),
            grid_spec=grid_spec,
            # Donate x (call operand 1, counting the scalar-prefetch arg) to the output;
            # verified clean on-device with this JAX version.
            input_output_aliases={1: 0},
            compiler_params=pltpu.CompilerParams(
                dimension_semantics=("parallel", "parallel"),
                vmem_limit_bytes=vmem_bytes,
            ),
        )(bias_idx, x, bias_table)

    if dim_p != dim:
        out = out[..., :dim]
    return out


if __name__ == "__main__":
    # Small shapes consistent with the module: dim divisible by 3 (and by 128 here).
    bsz, seq_len, dim, n_bias = 2, 8, 384, 3

    key = jax.random.PRNGKey(0)
    kx, kq, kk, kv, ki = jax.random.split(key, 5)

    x = jax.random.normal(kx, (bsz, seq_len, dim), dtype=jnp.float32)
    # Module __init__ uses zeros; use small deterministic values so the add is exercised.
    q_bias = 0.1 * jax.random.normal(kq, (n_bias, dim // 3), dtype=jnp.float32)
    k_bias = 0.1 * jax.random.normal(kk, (n_bias, dim // 3), dtype=jnp.float32)
    v_bias = 0.1 * jax.random.normal(kv, (n_bias, dim // 3), dtype=jnp.float32)
    bias_idx = jax.random.randint(ki, (bsz,), 0, n_bias, dtype=jnp.int32)

    # Pure-JAX reference (mirrors the PyTorch forward exactly); computed before the
    # kernel call since x is donated to the kernel output.
    bias_table_ref = jnp.concatenate([q_bias, k_bias, v_bias], axis=1)
    ref = x + bias_table_ref[bias_idx][:, None, :]

    out = bitfit_bias_forward(x, bias_idx, q_bias, k_bias, v_bias)
    out = jax.block_until_ready(out)

    assert out.shape == (bsz, seq_len, dim)
    assert jnp.allclose(out, ref, atol=1e-6), "mismatch vs reference"
    print("KERNEL_OK")
</pallas_src>

<mosaic_0001>
module attributes {stable_mosaic.version = 11 : i64} {
  func.func @_bitfit_kernel(%arg0: i32, %arg1: i32, %arg2: memref<2xi32, #tpu.memory_space<smem>>, %arg3: memref<1x8x384xf32, #tpu.memory_space<vmem>>, %arg4: memref<3x384xf32, #tpu.memory_space<vmem>>, %arg5: memref<1x8x384xf32, #tpu.memory_space<vmem>>) attributes {dimension_semantics = [#tpu.dimension_semantics<parallel>, #tpu.dimension_semantics<parallel>], iteration_bounds = array<i64: 2, 1>, scalar_prefetch = 1 : i64, scratch_operands = 0 : i64, tpu.core_type = #tpu.core_type<tc>, window_params = [{transform_indices = @transform_0, window_bounds = array<i64: 1, 8, 384>}, {pipeline_mode = #tpu.pipeline_mode<synchronous>, transform_indices = @transform_1, window_bounds = array<i64: 3, 384>}, {transform_indices = @transform_2, window_bounds = array<i64: 1, 8, 384>}]} {
    %0 = arith.index_cast %arg0 : i32 to index
    %1 = memref.load %arg2[%0] : memref<2xi32, #tpu.memory_space<smem>>
    %2 = arith.index_cast %1 : i32 to index
    %c0 = arith.constant 0 : index
    %3 = vector.load %arg4[%2, %c0] : memref<3x384xf32, #tpu.memory_space<vmem>>, vector<1x384xf32>
    %c0_0 = arith.constant 0 : index
    %c0_1 = arith.constant 0 : index
    %c0_2 = arith.constant 0 : index
    %4 = vector.load %arg3[%c0_0, %c0_1, %c0_2] : memref<1x8x384xf32, #tpu.memory_space<vmem>>, vector<1x8x384xf32>
    %5 = vector.shape_cast %4 : vector<1x8x384xf32> to vector<8x384xf32>
    %6 = vector.broadcast %3 : vector<1x384xf32> to vector<8x384xf32>
    %7 = arith.addf %5, %6 : vector<8x384xf32>
    %c0_3 = arith.constant 0 : index
    %c0_4 = arith.constant 0 : index
    %c0_5 = arith.constant 0 : index
    %8 = vector.load %arg5[%c0_3, %c0_4, %c0_5] : memref<1x8x384xf32, #tpu.memory_space<vmem>>, vector<1x8x384xf32>
    %9 = vector.shape_cast %8 : vector<1x8x384xf32> to vector<8x384xf32>
    %10 = vector.shape_cast %7 : vector<8x384xf32> to vector<1x8x384xf32>
    tpu.vector_store %arg5[%c0_3, %c0_4, %c0_5], %10 {strides = array<i32>} : memref<1x8x384xf32, #tpu.memory_space<vmem>>, vector<1x8x384xf32>,
    return
  }
  func.func @transform_0(%arg0: i32, %arg1: i32, %arg2: memref<2xi32, #tpu.memory_space<smem>>) -> (i32, i32, i32) {
    %c0_i32 = arith.constant 0 : i32
    %c0_i32_0 = arith.constant 0 : i32
    return %arg0, %arg1, %c0_i32 : i32, i32, i32
  }
  func.func @transform_1(%arg0: i32, %arg1: i32, %arg2: memref<2xi32, #tpu.memory_space<smem>>) -> (i32, i32) {
    %c0_i32 = arith.constant 0 : i32
    %c0_i32_0 = arith.constant 0 : i32
    %c0_i32_1 = arith.constant 0 : i32
    return %c0_i32, %c0_i32_0 : i32, i32
  }
  func.func @transform_2(%arg0: i32, %arg1: i32, %arg2: memref<2xi32, #tpu.memory_space<smem>>) -> (i32, i32, i32) {
    %c0_i32 = arith.constant 0 : i32
    %c0_i32_0 = arith.constant 0 : i32
    return %arg0, %arg1, %c0_i32 : i32, i32, i32
  }
}

</mosaic_0001>

<llo_original>
// kernel: tpu_custom_call.1
$region0: #{tpu_custom_call.1}
  #allocation0 [shape = 'u32[]', space=smem, size = 0x4, offset = 0x4, fixed_abs, tag = 'smem constant byte address 0x4 - core index']
  #allocation1 [shape = 'u32[144,128]{1,0:T(1,128)}', space=vmem, size = 0x12000, scoped, tag = 'internal scratch']
  #allocation2 [shape = 's32[1]{0}', space=sflag, size = 0x4, scoped, tag = 'scoped memory for tpu_custom_call.1']
  #allocation3 [shape = 'u8[512]{0}', space=smem, size = 0x200, scoped, tag = 'prefetched SMEM operand 0']
  %s0 = inlined_call_operand.vmem [shape: s32[2], index: 0, kind: input, shape index: {}]
  %s1 = inlined_call_operand.hbm [shape: f32[2,8,384], index: 1, kind: input, shape index: {}, may-alias: {1,3}]
  %s2 = inlined_call_operand.vmem [shape: f32[3,384], index: 2, kind: input, shape index: {}]
  %s3 = inlined_call_operand.hbm [shape: f32[2,8,384], index: 3, kind: output, shape index: {}, may-alias: {1,3}]
  %s4 = sld [smem:[#allocation0]]
  $region45: #{tpu_custom_call.1} parent=0
    _
  %s6 = ssub.s32 1, %s4
  %s7 = scalar_select 0, %s6, %s4
  %s8 = sshll.u32 %s0, 4
  %s9 = int_to_ptr.vmem [resolvable:$true] %s8
  %11 = dma.vmem_to_smem %s9, 16, [#allocation3], [#allocation2]
  %12 = dma.done [#allocation2], 16
  %13 = sfence
  $region1: #{tpu_custom_call.1} parent=0
    #allocation4 [shape = 'u8[24576]{0}', space=vmem, size = 0x6000, scoped, tag = 'input window, operand 1']
    #allocation5 [shape = 's32[2]{0}', space=sflag, size = 0x8, scoped, tag = 'scoped memory for tpu_custom_call.1']
    #allocation6 [shape = 's32[2]{0}', space=sflag, size = 0x8, scoped, tag = 'scoped memory for tpu_custom_call.1']
    #allocation7 [shape = 'u8[24576]{0}', space=vmem, size = 0x6000, scoped, tag = 'output window, operand 0']
    %14 = vsyncpa [#allocation5], 0
    %s15 = scalar_lea.sflag [#allocation5], 1
    %16 = vsyncpa %s15, 0
    %17 = vsyncpa [#allocation6], 0
    %s18 = scalar_lea.sflag [#allocation6], 1
    %19 = vsyncpa %s18, 0
    loop: start=0, step=1, limit=4
    $region2: #{tpu_custom_call.1} parent=1 // loop_pre_header
      _
    $region3: #{tpu_custom_call.1} parent=1 // loop_header
      %s21 = sphi 0, %s25
      %p22 = scmp.ge.s32.totalorder %s21, 4
      %s28 = sphi 0, %s40
      %s29 = sphi 0, %s36
      %s30 = sphi 0, %s28
      %s31 = sphi 0, %s29
      %s32 = sphi 0, %s30
      %s33 = sphi 0, %s31
      %s45 = sphi 0, %s47
      %s48 = sphi 0, %s45
      %s49 = sphi 0, %s48
      %s65 = sphi 0, %s49
      %s69 = sphi 0, %s69
      %s71 = sphi 0, %s69
      %s72 = sphi 0, %s71
      %s86 = sphi 0, %s72
      %s94 = sphi 0, %s96
      %s97 = sphi 0, %s94
      %s98 = sphi 0, %s97
      %s114 = sphi 0, %s98
    $region4: #{tpu_custom_call.1} parent=1 // loop_header_branch
      %24 = sbr.rel (%p22) target = $region8
    $region5: #{tpu_custom_call.1} parent=1 // loop_body
      %s26 = ssub.s32 %s21, 1
      %s27 = ssub.s32 %s21, 2
      %s34 = sadd.s32 1, %s29
      %p35 = scmp.ge.s32.totalorder %s34, 1
      %s36 = scalar_select %p35, 0, %s34
      %s37 = sadd.s32 1, %s28
      %s38 = scalar_select %p35, %s37, %s28
      %p39 = scmp.ge.s32.totalorder %s38, 2
      %s40 = scalar_select %p39, 0, %s38
      %s41 = ssub.s32 %s28, %s40
      %s42 = ssub.s32 %s29, %s36
      %s43 = sor.u32 %s41, %s42
      %p44 = scmp.eq.s32.totalorder %s43, 0
      %s46 = sadd.s32 %s45, 1
      %s47 = scalar_select %p44, %s45, %s46
      %p50 = pneg %p44
      %p51 = scmp.eq.s32.totalorder %s21, 1
      %p52 = por %p50, %p51
      %p53 = scmp.ne.s32.totalorder %s45, %s48
      %p54 = scmp.eq.s32.totalorder %s21, 0
      %p55 = por %p53, %p54
      %p56 = scmp.ne.s32.totalorder %s45, %s48
      %p57 = scmp.eq.s32.totalorder %s26, 1
      %p58 = por %p56, %p57
      %p59 = scmp.ne.s32.totalorder %s48, %s49
      %p60 = scmp.eq.s32.totalorder %s26, 0
      %p61 = por %p59, %p60
      %p62 = scmp.ne.s32.totalorder %s48, %s49
      %p63 = scmp.eq.s32.totalorder %s27, 1
      %p64 = por %p62, %p63
      %p66 = scmp.ne.s32.totalorder %s49, %s65
      %p67 = scmp.eq.s32.totalorder %s27, 0
      %p68 = por %p66, %p67
      %s70 = sadd.s32 %s69, 1
      %p73 = scmp.eq.s32.totalorder %s21, 1
      %p74 = scmp.ne.s32.totalorder %s69, %s71
      %p75 = scmp.eq.s32.totalorder %s21, 0
      %p76 = por %p74, %p75
      %p77 = scmp.ne.s32.totalorder %s69, %s71
      %p78 = scmp.eq.s32.totalorder %s26, 1
      %p79 = por %p77, %p78
      %p80 = scmp.ne.s32.totalorder %s71, %s72
      %p81 = scmp.eq.s32.totalorder %s26, 0
      %p82 = por %p80, %p81
      %p83 = scmp.ne.s32.totalorder %s71, %s72
      %p84 = scmp.eq.s32.totalorder %s27, 1
      %p85 = por %p83, %p84
      %p87 = scmp.ne.s32.totalorder %s72, %s86
      %p88 = scmp.eq.s32.totalorder %s27, 0
      %p89 = por %p87, %p88
      %s90 = ssub.s32 %s28, %s40
      %s91 = ssub.s32 %s29, %s36
      %s92 = sor.u32 %s90, %s91
      %p93 = scmp.eq.s32.totalorder %s92, 0
      %s95 = sadd.s32 %s94, 1
      %s96 = scalar_select %p93, %s94, %s95
      %p99 = pneg %p93
      %p100 = scmp.eq.s32.totalorder %s21, 1
      %p101 = por %p99, %p100
      %p102 = scmp.ne.s32.totalorder %s94, %s97
      %p103 = scmp.eq.s32.totalorder %s21, 0
      %p104 = por %p102, %p103
      %p105 = scmp.ne.s32.totalorder %s94, %s97
      %p106 = scmp.eq.s32.totalorder %s26, 1
      %p107 = por %p105, %p106
      %p108 = scmp.ne.s32.totalorder %s97, %s98
      %p109 = scmp.eq.s32.totalorder %s26, 0
      %p110 = por %p108, %p109
      %p111 = scmp.ne.s32.totalorder %s97, %s98
      %p112 = scmp.eq.s32.totalorder %s27, 1
      %p113 = por %p111, %p112
      %p115 = scmp.ne.s32.totalorder %s98, %s114
      %p116 = scmp.eq.s32.totalorder %s27, 0
      %p117 = por %p115, %p116
      %p118 = scmp.le.s32.totalorder 1, %s21
      %p119 = scmp.lt.s32.totalorder %s21, 3
      %p120 = pnand %p118, %p119
      %p121 = pneg %p120
      // Predicated region
      $region9: #{tpu_custom_call.1} parent=5 // pred_check
        _
      $region10: #{tpu_custom_call.1} parent=5 // pred_check_branch
        %123 = sbr.rel (%p120) target = $region12
      $region11: #{tpu_custom_call.1} parent=5 // pred_region
        %s124 = ssub.s32 %s21, 1
        // Predicated region
        $region13: #{tpu_custom_call.1} parent=11 // pred_check
          %p125 = pneg %p82
        $region14: #{tpu_custom_call.1} parent=11 // pred_check_branch
          %127 = sbr.rel (%p125) target = $region16
        $region15: #{tpu_custom_call.1} parent=11 // pred_region
          _
        $region16: #{tpu_custom_call.1} parent=11 // pred_fallthru
          _
      $region12: #{tpu_custom_call.1} parent=5 // pred_fallthru
        _
      %p128 = scmp.lt.s32.totalorder %s21, 2
      // Predicated region
      $region17: #{tpu_custom_call.1} parent=5 // pred_check
        %p129 = pneg %p128
      $region18: #{tpu_custom_call.1} parent=5 // pred_check_branch
        %131 = sbr.rel (%p129) target = $region20
      $region19: #{tpu_custom_call.1} parent=5 // pred_region
        // Predicated region
        $region21: #{tpu_custom_call.1} parent=19 // pred_check
          %p132 = pneg %p55
        $region22: #{tpu_custom_call.1} parent=19 // pred_check_branch
          %134 = sbr.rel (%p132) target = $region24
        $region23: #{tpu_custom_call.1} parent=19 // pred_region
          %s135 = sand.u32 %s45, 1
          %s136 = scalar_lea.sflag [#allocation5], %s135
          %s137 = sand.u32 %s45, 1
          %s138 = smul.addr %s137, 24
          %s139 = scalar_lea.vmem [#allocation4], %s138
          %s141 = ssub.s32 384, 384
          %142 = vsyncadd %s136, %s141
          %s143 = smul.addr %s29, 3
          %s144 = smul.addr %s28, 3
          %s145 = sadd.s32 %s143, %s144
          %s146 = smul.addr %s145, 128
          %s147 = scalar_lea.hbm %s1, %s146
          %s149 = sshll.u32 %s139, 4
          %s150 = int_to_ptr.vmem [resolvable:$true] %s149
          %152 = dma.hbm_to_vmem [thread:$0]  %s147, 384, %s150, %s136
        $region24: #{tpu_custom_call.1} parent=19 // pred_fallthru
          _
      $region20: #{tpu_custom_call.1} parent=5 // pred_fallthru
        _
      %p153 = scmp.le.s32.totalorder 1, %s21
      %p154 = scmp.lt.s32.totalorder %s21, 3
      %p155 = pnand %p153, %p154
      %p156 = pneg %p155
      // Predicated region
      $region25: #{tpu_custom_call.1} parent=5 // pred_check
        _
      $region26: #{tpu_custom_call.1} parent=5 // pred_check_branch
        %158 = sbr.rel (%p155) target = $region28
      $region27: #{tpu_custom_call.1} parent=5 // pred_region
        %s159 = ssub.s32 %s21, 1
        %s160 = sand.u32 %s48, 1
        %s161 = scalar_lea.sflag [#allocation5], %s160
        %s162 = sand.u32 %s48, 1
        %s163 = smul.addr %s162, 24
        %s164 = scalar_lea.vmem [#allocation4], %s163
        // Predicated region
        $region29: #{tpu_custom_call.1} parent=27 // pred_check
          %p165 = pneg %p61
        $region30: #{tpu_custom_call.1} parent=27 // pred_check_branch
          %167 = sbr.rel (%p165) target = $region32
        $region31: #{tpu_custom_call.1} parent=27 // pred_region
          %168 = dma.done %s161, 384
        $region32: #{tpu_custom_call.1} parent=27 // pred_fallthru
          _
        %s169 = sand.u32 %s48, 1
        %s170 = scalar_lea.sflag [#allocation5], %s169
        %s171 = sand.u32 %s48, 1
        %s172 = smul.addr %s171, 24
        %s173 = scalar_lea.vmem [#allocation4], %s172
        %p174 = pneg %p61
        %p175 = pneg %p58
        %p176 = pneg %p82
        %p177 = pneg %p79
        %p178 = pneg %p110
        %p179 = pneg %p107
        %s180 = sand.u32 %s97, 1
        %s181 = scalar_lea.sflag [#allocation6], %s180
        %s182 = sand.u32 %s97, 1
        %s183 = smul.addr %s182, 24
        %s184 = scalar_lea.vmem [#allocation7], %s183
        %s185 = sld [smem:[#allocation3 + %s30]]
        %s186 = sshra.s32 %s185, 2
        %s187 = sand.u32 %s185, 3
        %s188 = sshra.s32 %s185, 2
        %s189 = sand.u32 %s185, 3
        %s190 = smul.u32 %s186, 3
        %s191 = smul.u32 %s190, 4
        %s192 = sadd.s32 %s191, %s189
        %s193 = scalar_lea.vmem %s2, %s192
        %v194 = vld [vmem:[%s193] ss:$4 sm:$0x7]
        %v195 = vld [vmem:[%s164] sm:$0xff]
        %v196 = vld [vmem:[%s164 + $0x8] sm:$0xff]
        %v197 = vld [vmem:[%s164 + $0x10] sm:$0xff]
        %v199 = vlaneseq
        %v200 = vshrl.u32 %v199, 7
        %v201 = vsub.s32 0, %v200
        %v202 = vrot.slane %v194, %v201
        %v203 = vlaneseq
        %v204 = vshrl.u32 %v203, 7
        %v205 = vsub.s32 1, %v204
        %v206 = vrot.slane %v194, %v205
        %v207 = vlaneseq
        %v208 = vshrl.u32 %v207, 7
        %v209 = vsub.s32 2, %v208
        %v210 = vrot.slane %v194, %v209
        %v214 = vadd.f32 %v195, %v202
        %v215 = vadd.f32 %v196, %v206
        %v216 = vadd.f32 %v197, %v210
        %217 = vst [vmem:[%s184] sm:$0xff] %v214
        %218 = vst [vmem:[%s184 + $0x8] sm:$0xff] %v215
        %219 = vst [vmem:[%s184 + $0x10] sm:$0xff] %v216
        %s220 = sand.u32 %s97, 1
        %s221 = scalar_lea.sflag [#allocation6], %s220
        %s222 = sand.u32 %s97, 1
        %s223 = smul.addr %s222, 24
        %s224 = scalar_lea.vmem [#allocation7], %s223
        // Predicated region
        $region33: #{tpu_custom_call.1} parent=27 // pred_check
          %p225 = pneg %p107
        $region34: #{tpu_custom_call.1} parent=27 // pred_check_branch
          %227 = sbr.rel (%p225) target = $region36
        $region35: #{tpu_custom_call.1} parent=27 // pred_region
          %s229 = ssub.s32 384, 384
          %230 = vsyncadd %s221, %s229
          %s231 = smul.addr %s31, 3
          %s232 = smul.addr %s30, 3
          %s233 = sadd.s32 %s231, %s232
          %s234 = smul.addr %s233, 128
          %s235 = scalar_lea.hbm %s3, %s234
          %s237 = sshll.u32 %s224, 4
          %s238 = int_to_ptr.vmem [resolvable:$true] %s237
          %240 = dma.vmem_to_hbm [thread:$0]  %s238, 384, %s235, %s221
        $region36: #{tpu_custom_call.1} parent=27 // pred_fallthru
          _
      $region28: #{tpu_custom_call.1} parent=5 // pred_fallthru
        _
      %p241 = scmp.le.s32.totalorder 2, %s21
      // Predicated region
      $region37: #{tpu_custom_call.1} parent=5 // pred_check
        %p242 = pneg %p241
      $region38: #{tpu_custom_call.1} parent=5 // pred_check_branch
        %244 = sbr.rel (%p242) target = $region40
      $region39: #{tpu_custom_call.1} parent=5 // pred_region
        %s245 = ssub.s32 %s21, 2
        // Predicated region
        $region41: #{tpu_custom_call.1} parent=39 // pred_check
          %p246 = pneg %p113
        $region42: #{tpu_custom_call.1} parent=39 // pred_check_branch
          %248 = sbr.rel (%p246) target = $region44
        $region43: #{tpu_custom_call.1} parent=39 // pred_region
          %s249 = sand.u32 %s98, 1
          %s250 = scalar_lea.sflag [#allocation6], %s249
          %s251 = sand.u32 %s98, 1
          %s252 = smul.addr %s251, 24
          %s253 = scalar_lea.vmem [#allocation7], %s252
          %254 = dma.done %s250, 384
        $region44: #{tpu_custom_call.1} parent=39 // pred_fallthru
          _
      $region40: #{tpu_custom_call.1} parent=5 // pred_fallthru
        _
    $region6: #{tpu_custom_call.1} parent=1 // loop_footer
      %s25 = sadd.s32 1, %s21
    $region7: #{tpu_custom_call.1} parent=1 // loop_footer_branch
      %20 = sbr.rel target = $region3
    $region8: #{tpu_custom_call.1} parent=1 // loop_exit
      _
    %255 = vsyncpa [#allocation5], 1
    %s256 = scalar_lea.sflag [#allocation5], 1
    %257 = vsyncpa %s256, 1
    %258 = vsyncpa [#allocation6], 1
    %s259 = scalar_lea.sflag [#allocation6], 1
    %260 = vsyncpa %s259, 1

</llo_original>
